<compile_context>
chip_gen: v5e
topology: v5e:2x2
jax: 0.10.0
libtpu: 0.0.40
codegen_flags: <defaults>
</compile_context>

<pallas_src>
import jax
import jax.numpy as jnp
from jax.experimental import pallas as pl
from jax.experimental.pallas import tpu as pltpu


def _round_up(v, m):
    return (v + m - 1) // m * m


def _patch_embed_kernel(x_ref, w_ref, m_ref, me_ref, o_ref):
    # x_ref : (tm, P)  flattened patches
    # w_ref : (P, D)   value_embedding weight, already transposed (W.T)
    # m_ref : (tm, 1)  per-patch scalar mask (f32)
    # me_ref: (1, D)   mask_embedding parameter (f32)
    emb = jnp.dot(x_ref[...], w_ref[...], preferred_element_type=jnp.float32)
    m = m_ref[...].astype(jnp.float32)                    # (tm, 1)
    me = me_ref[...].astype(jnp.float32)                  # (1, D)
    # m*emb + (1-m)*me  ==  me + m*(emb - me)
    o_ref[...] = (me + m * (emb - me)).astype(o_ref.dtype)


def _safe_vmem_cap_bytes():
    """0.8 * physical VMEM; conservative fallback if the query is unavailable."""
    try:
        cap = int(pltpu.get_tpu_info().vmem_capacity_bytes)
    except Exception:
        cap = 64 * 1024 * 1024  # v7x physical — the smallest of the three gens
    return int(0.8 * cap)


def patch_embedding_forward(x, mask, w_t, mask_embedding, *, patch_len, d_model,
                            tm=2048, out_dtype=None):
    """x: [B, C, N, P], mask: [B, C, seq_len], w_t: [P, D], mask_embedding: [D].

    out_dtype: output dtype (default x.dtype). Pass jnp.bfloat16 to halve the
    output writeback if downstream accepts bf16 activations.
    """
    B, C, N, P = x.shape
    assert P == patch_len
    D = d_model
    assert w_t.shape == (P, D)
    assert mask.shape == (B, C, N * P)
    assert tm % 256 == 0, "row tile must be a multiple of 256"
    out_dtype = x.dtype if out_dtype is None else out_dtype

    M = B * C * N
    x2 = x.reshape(M, P)                                       # free reshape
    # Per-patch scalar mask (column 0 of each patch), kept in f32.
    m2 = mask.reshape(M, P)[:, 0:1].astype(jnp.float32)        # (M, 1)
    me2 = mask_embedding.reshape(1, D).astype(jnp.float32)     # (1, D), f32
    w_t = w_t.astype(x.dtype)                                  # homogeneous MXU dtypes

    # Row tile: large to amortize per-step overhead (kernel sits on the HBM
    # writeback roofline). Guarantee >= 2 grid steps when M > 1024 so the
    # "parallel" grid axis can shard across v7x's two TensorCores.
    if M <= 1024:
        tm_eff = M                                # full-extent block is allowed
    else:
        tm_eff = min(tm, _round_up(pl.cdiv(M, 2), 256))
    num_tiles = pl.cdiv(M, tm_eff)                # partial tail tile is fine

    # Exact double-buffered VMEM footprint (lane/sublane padded) + 25% margin,
    # clamped to 0.8 * physical VMEM (never request the whole 64 MiB on v7x).
    def lane(n):  # last-dim pad
        return _round_up(max(n, 1), 128)

    def sub(n):   # second-to-last-dim pad
        return _round_up(max(n, 1), 8)

    x_item = jnp.dtype(x.dtype).itemsize
    m_item = jnp.dtype(m2.dtype).itemsize
    w_item = jnp.dtype(w_t.dtype).itemsize
    me_item = jnp.dtype(me2.dtype).itemsize
    o_item = jnp.dtype(out_dtype).itemsize

    footprint = (
        2 * tm_eff * lane(P) * x_item          # x tile (double-buffered)
        + 2 * tm_eff * lane(1) * m_item        # mask tile
        + 2 * sub(P) * lane(D) * w_item        # weight (resident, 2 bufs)
        + 2 * sub(1) * lane(D) * me_item       # mask_embedding
        + 2 * tm_eff * lane(D) * o_item        # output tile
    )
    vmem_limit = int(min(max(int(footprint * 1.25), 32 * 1024 * 1024),
                         _safe_vmem_cap_bytes()))

    cost = pl.CostEstimate(
        flops=2 * M * P * D,
        transcendentals=0,
        bytes_accessed=(x2.size * x_item + m2.size * m_item + w_t.size * w_item
                        + me2.size * me_item + M * D * o_item),
    )

    out2 = pl.pallas_call(
        _patch_embed_kernel,
        out_shape=jax.ShapeDtypeStruct((M, D), out_dtype),
        grid_spec=pltpu.PrefetchScalarGridSpec(
            num_scalar_prefetch=0,
            grid=(num_tiles,),
            in_specs=[
                pl.BlockSpec((tm_eff, P), lambda i: (i, 0)),   # x rows
                pl.BlockSpec((P, D), lambda i: (0, 0)),        # W.T (resident)
                pl.BlockSpec((tm_eff, 1), lambda i: (i, 0)),   # per-patch mask
                pl.BlockSpec((1, D), lambda i: (0, 0)),        # mask_embedding
            ],
            out_specs=pl.BlockSpec((tm_eff, D), lambda i: (i, 0)),
        ),
        compiler_params=pltpu.CompilerParams(
            dimension_semantics=("parallel",),
            vmem_limit_bytes=vmem_limit,
        ),
        cost_estimate=cost,
    )(x2, w_t, m2, me2)

    # TODO(synk): dropout is identity at inference; positional embedding is off
    # by default (add_positional_embedding=False) and is omitted here.
    return out2.reshape(B, C, N, D)


def _orthogonal(key, rows, cols, gain):
    """Deterministic (semi-)orthogonal init, like torch.nn.init.orthogonal_."""
    flat = jax.random.normal(key, (max(rows, cols), min(rows, cols)), jnp.float32)
    q, r = jnp.linalg.qr(flat)
    q = q * jnp.sign(jnp.diagonal(r))[None, :]
    if rows < cols:
        q = q.T
    return gain * q[:rows, :cols]


if __name__ == "__main__":
    # Small shapes consistent with the module's forward contract.
    # d_model=128 keeps the output lane-dense (multiple of 128) while staying small.
    B, C, N, P, D = 2, 4, 8, 8, 128       # batch, channels, n_patches, patch_len, d_model
    seq_len = N * P

    key = jax.random.PRNGKey(0)
    kx, km, kw = jax.random.split(key, 3)

    x = jax.random.normal(kx, (B, C, N, P), jnp.float32)
    # binary mask over the raw sequence, per channel
    mask = (jax.random.uniform(km, (B, C, seq_len)) > 0.3).astype(jnp.float32)

    # Parameters (matching __init__ shapes):
    #   value_embedding.weight: [d_model, patch_len], orthogonal init, gain 1.41
    #   mask_embedding: zeros(d_model)
    w = _orthogonal(kw, D, P, gain=1.41)     # [D, P]
    w_t = w.T                                # [P, D]; kernel computes x @ W.T
    mask_embedding = jnp.zeros((D,), jnp.float32)

    out = patch_embedding_forward(x, mask, w_t, mask_embedding,
                                  patch_len=P, d_model=D)
    out = jax.block_until_ready(out)

    # Pure-JAX reference for verification.
    mask_patch = mask.reshape(B, C, N, P)[:, :, :, 0][..., None]     # [B,C,N,1]
    ref = mask_patch * jnp.einsum("bcnp,dp->bcnd", x, w) \
        + (1.0 - mask_patch) * mask_embedding[None, None, None, :]

    assert out.shape == (B, C, N, D)
    assert jnp.allclose(out, ref, atol=1e-5, rtol=1e-5), "mismatch vs reference"

    print("KERNEL_OK")
</pallas_src>

<mosaic_0001>
module attributes {stable_mosaic.version = 11 : i64} {
  func.func @_patch_embed_kernel(%arg0: i32, %arg1: memref<64x8xf32, #tpu.memory_space<vmem>>, %arg2: memref<8x128xf32, #tpu.memory_space<vmem>>, %arg3: memref<64x1xf32, #tpu.memory_space<vmem>>, %arg4: memref<1x128xf32, #tpu.memory_space<vmem>>, %arg5: memref<64x128xf32, #tpu.memory_space<vmem>>) attributes {dimension_semantics = [#tpu.dimension_semantics<parallel>], iteration_bounds = array<i64: 1>, scalar_prefetch = 0 : i64, scratch_operands = 0 : i64, tpu.core_type = #tpu.core_type<tc>, window_params = [{transform_indices = @transform_0, window_bounds = array<i64: 64, 8>}, {pipeline_mode = #tpu.pipeline_mode<synchronous>, transform_indices = @transform_1, window_bounds = array<i64: 8, 128>}, {transform_indices = @transform_2, window_bounds = array<i64: 64, 1>}, {pipeline_mode = #tpu.pipeline_mode<synchronous>, transform_indices = @transform_3, window_bounds = array<i64: 1, 128>}, {transform_indices = @transform_4, window_bounds = array<i64: 64, 128>}]} {
    %c0 = arith.constant 0 : index
    %c0_0 = arith.constant 0 : index
    %0 = vector.load %arg1[%c0, %c0_0] : memref<64x8xf32, #tpu.memory_space<vmem>>, vector<64x8xf32>
    %c0_1 = arith.constant 0 : index
    %c0_2 = arith.constant 0 : index
    %1 = vector.load %arg2[%c0_1, %c0_2] : memref<8x128xf32, #tpu.memory_space<vmem>>, vector<8x128xf32>
    %cst = arith.constant dense<0.000000e+00> : vector<64x128xf32>
    %2 = tpu.matmul %0, %1, %cst {dimension_numbers = #tpu.dot_dimension_numbers<[1], [0], [0], [1], [0, 0, 1, 1], [], []>} : vector<64x8xf32>, vector<8x128xf32>, vector<64x128xf32> -> vector<64x128xf32>
    %c0_3 = arith.constant 0 : index
    %c0_4 = arith.constant 0 : index
    %3 = vector.load %arg3[%c0_3, %c0_4] : memref<64x1xf32, #tpu.memory_space<vmem>>, vector<64x1xf32>
    %c0_5 = arith.constant 0 : index
    %c0_6 = arith.constant 0 : index
    %4 = vector.load %arg4[%c0_5, %c0_6] : memref<1x128xf32, #tpu.memory_space<vmem>>, vector<1x128xf32>
    %5 = vector.broadcast %4 : vector<1x128xf32> to vector<64x128xf32>
    %6 = arith.subf %2, %5 : vector<64x128xf32>
    %7 = vector.broadcast %3 : vector<64x1xf32> to vector<64x128xf32>
    %8 = arith.mulf %7, %6 : vector<64x128xf32>
    %9 = vector.broadcast %4 : vector<1x128xf32> to vector<64x128xf32>
    %10 = arith.addf %9, %8 : vector<64x128xf32>
    %c0_7 = arith.constant 0 : index
    %c0_8 = arith.constant 0 : index
    %11 = vector.load %arg5[%c0_7, %c0_8] : memref<64x128xf32, #tpu.memory_space<vmem>>, vector<64x128xf32>
    tpu.vector_store %arg5[%c0_7, %c0_8], %10 {strides = array<i32>} : memref<64x128xf32, #tpu.memory_space<vmem>>, vector<64x128xf32>,
    return
  }
  func.func @transform_0(%arg0: i32) -> (i32, i32) {
    %c0_i32 = arith.constant 0 : i32
    %c0_i32_0 = arith.constant 0 : i32
    return %arg0, %c0_i32 : i32, i32
  }
  func.func @transform_1(%arg0: i32) -> (i32, i32) {
    %c0_i32 = arith.constant 0 : i32
    %c0_i32_0 = arith.constant 0 : i32
    %c0_i32_1 = arith.constant 0 : i32
    return %c0_i32, %c0_i32_0 : i32, i32
  }
  func.func @transform_2(%arg0: i32) -> (i32, i32) {
    %c0_i32 = arith.constant 0 : i32
    %c0_i32_0 = arith.constant 0 : i32
    return %arg0, %c0_i32 : i32, i32
  }
  func.func @transform_3(%arg0: i32) -> (i32, i32) {
    %c0_i32 = arith.constant 0 : i32
    %c0_i32_0 = arith.constant 0 : i32
    %c0_i32_1 = arith.constant 0 : i32
    return %c0_i32, %c0_i32_0 : i32, i32
  }
  func.func @transform_4(%arg0: i32) -> (i32, i32) {
    %c0_i32 = arith.constant 0 : i32
    %c0_i32_0 = arith.constant 0 : i32
    return %arg0, %c0_i32 : i32, i32
  }
}

</mosaic_0001>

<llo_original>
// kernel: tpu_custom_call.1
$region0: #{tpu_custom_call.1}
  #allocation0 [shape = 'u32[]', space=smem, size = 0x4, offset = 0x4, fixed_abs, tag = 'smem constant byte address 0x4 - core index']
  #allocation1 [shape = 'u32[72,128]{1,0:T(1,128)}', space=vmem, size = 0x9000, scoped, tag = 'internal scratch']
  %s0 = inlined_call_operand.vmem [shape: f32[64,8], index: 0, kind: input, shape index: {}]
  %s1 = inlined_call_operand.vmem [shape: f32[8,128], index: 1, kind: input, shape index: {}]
  %s2 = inlined_call_operand.vmem [shape: f32[64,1], index: 2, kind: input, shape index: {}]
  %s3 = inlined_call_operand.vmem [shape: f32[1,128], index: 3, kind: input, shape index: {}]
  %s4 = inlined_call_operand.hbm [shape: f32[64,128], index: 4, kind: output, shape index: {}]
  %s5 = sld [smem:[#allocation0]]
  $region26: #{tpu_custom_call.1} parent=0
    _
  %s7 = ssub.s32 1, %s5
  %s8 = scalar_select 0, %s7, %s5
  $region1: #{tpu_custom_call.1} parent=0
    #allocation2 [shape = 'u8[32768]{0}', space=vmem, size = 0x8000, scoped, tag = 'output window, operand 0, single buffered']
    #allocation3 [shape = 's32[1]{0}', space=sflag, size = 0x4, scoped, tag = 'scoped memory for tpu_custom_call.1']
    %9 = vsyncpa [#allocation3], 0
    // Predicated region
    $region2: #{tpu_custom_call.1} parent=1 // pred_check
      _
    $region3: #{tpu_custom_call.1} parent=1 // pred_check_branch
      %11 = sbr.rel (0) target = $region5
    $region4: #{tpu_custom_call.1} parent=1 // pred_region
      _
    $region5: #{tpu_custom_call.1} parent=1 // pred_fallthru
      _
    // Predicated region
    $region6: #{tpu_custom_call.1} parent=1 // pred_check
      _
    $region7: #{tpu_custom_call.1} parent=1 // pred_check_branch
      %13 = sbr.rel (0) target = $region9
    $region8: #{tpu_custom_call.1} parent=1 // pred_region
      _
    $region9: #{tpu_custom_call.1} parent=1 // pred_fallthru
      _
    // Predicated region
    $region10: #{tpu_custom_call.1} parent=1 // pred_check
      _
    $region11: #{tpu_custom_call.1} parent=1 // pred_check_branch
      %15 = sbr.rel (0) target = $region13
    $region12: #{tpu_custom_call.1} parent=1 // pred_region
      _
    $region13: #{tpu_custom_call.1} parent=1 // pred_fallthru
      _
    // Predicated region
    $region14: #{tpu_custom_call.1} parent=1 // pred_check
      _
    $region15: #{tpu_custom_call.1} parent=1 // pred_check_branch
      %17 = sbr.rel (0) target = $region17
    $region16: #{tpu_custom_call.1} parent=1 // pred_region
      _
    $region17: #{tpu_custom_call.1} parent=1 // pred_fallthru
      _
    %v18 = vld [vmem:[%s0] sm:$0xff]
    %v19 = vld [vmem:[%s0 + $0x8] sm:$0xff]
    %v20 = vld [vmem:[%s0 + $0x10] sm:$0xff]
    %v21 = vld [vmem:[%s0 + $0x18] sm:$0xff]
    %v22 = vld [vmem:[%s0 + $0x20] sm:$0xff]
    %v23 = vld [vmem:[%s0 + $0x28] sm:$0xff]
    %v24 = vld [vmem:[%s0 + $0x30] sm:$0xff]
    %v25 = vld [vmem:[%s0 + $0x38] sm:$0xff]
    %v26 = vld [vmem:[%s1] sm:$0xff]
    %vm27 = vcmask 64512
    %v29 = vsel %vm27, %v18, 0
    %v32 = vsel %vm27, %v19, 0
    %v35 = vsel %vm27, %v20, 0
    %v38 = vsel %vm27, %v21, 0
    %v41 = vsel %vm27, %v22, 0
    %v44 = vsel %vm27, %v23, 0
    %v47 = vsel %vm27, %v24, 0
    %v50 = vsel %vm27, %v25, 0
    %52 = vmatpush.msra.mxu0 0.0
    %53 = vmatpush.msra.mxu0 0.0
    %54 = vmatpush.msra.mxu0 0.0
    %55 = vmatpush.msra.mxu0 0.0
    %56 = vmatpush.msra.mxu0 0.0
    %57 = vmatpush.msra.mxu0 0.0
    %58 = vmatpush.msra.mxu0 0.0
    %59 = vmatpush.msra.mxu0 0.0
    %60 = vmatpush.msra.mxu0 0.0
    %61 = vmatpush.msra.mxu0 0.0
    %62 = vmatpush.msra.mxu0 0.0
    %63 = vmatpush.msra.mxu0 0.0
    %64 = vmatpush.msra.mxu0 0.0
    %65 = vmatpush.msra.mxu0 0.0
    %66 = vmatpush.msra.mxu0 0.0
    %67 = vmatpush.msra.mxu0 %v26
    %68 = vmatmul.f32.gmra.mxu0 %v29
    %v69 = vpop.f32.mrf.mxu0
    %v70 = vadd.f32 0.0, %v69
    %71 = vmatmul.f32.gmra.mxu0 %v32
    %v72 = vpop.f32.mrf.mxu0
    %v73 = vadd.f32 0.0, %v72
    %74 = vmatmul.f32.gmra.mxu0 %v35
    %v75 = vpop.f32.mrf.mxu0
    %v76 = vadd.f32 0.0, %v75
    %77 = vmatmul.f32.gmra.mxu0 %v38
    %v78 = vpop.f32.mrf.mxu0
    %v79 = vadd.f32 0.0, %v78
    %80 = vmatmul.f32.gmra.mxu0 %v41
    %v81 = vpop.f32.mrf.mxu0
    %v82 = vadd.f32 0.0, %v81
    %83 = vmatmul.f32.gmra.mxu0 %v44
    %v84 = vpop.f32.mrf.mxu0
    %v85 = vadd.f32 0.0, %v84
    %86 = vmatmul.f32.gmra.mxu0 %v47
    %v87 = vpop.f32.mrf.mxu0
    %v88 = vadd.f32 0.0, %v87
    %89 = vmatmul.f32.gmra.mxu0 %v50
    %v90 = vpop.f32.mrf.mxu0
    %v91 = vadd.f32 0.0, %v90
    %92 = vdwg.mxu0
    %v93 = vld [vmem:[%s2] sm:$0xff]
    %v94 = vld [vmem:[%s2 + $0x8] sm:$0xff]
    %v95 = vld [vmem:[%s2 + $0x10] sm:$0xff]
    %v96 = vld [vmem:[%s2 + $0x18] sm:$0xff]
    %v97 = vld [vmem:[%s2 + $0x20] sm:$0xff]
    %v98 = vld [vmem:[%s2 + $0x28] sm:$0xff]
    %v99 = vld [vmem:[%s2 + $0x30] sm:$0xff]
    %v100 = vld [vmem:[%s2 + $0x38] sm:$0xff]
    %v101 = vld [vmem:[%s3] sm:$0x1]
    %v103 = vperm.slane %v101, 0
    %v105 = vsub.f32 %v70, %v103
    %v106 = vsub.f32 %v73, %v103
    %v107 = vsub.f32 %v76, %v103
    %v108 = vsub.f32 %v79, %v103
    %v109 = vsub.f32 %v82, %v103
    %v110 = vsub.f32 %v85, %v103
    %v111 = vsub.f32 %v88, %v103
    %v112 = vsub.f32 %v91, %v103
    %114 = vset.pattern.permute.xlu0 0
    %115 = vperm.xlu0 %114, %v93
    %v116 = vpop.permute.xlu0 %115
    %119 = vset.pattern.permute.xlu0 0
    %120 = vperm.xlu0 %119, %v94
    %v121 = vpop.permute.xlu0 %120
    %124 = vset.pattern.permute.xlu0 0
    %125 = vperm.xlu0 %124, %v95
    %v126 = vpop.permute.xlu0 %125
    %129 = vset.pattern.permute.xlu0 0
    %130 = vperm.xlu0 %129, %v96
    %v131 = vpop.permute.xlu0 %130
    %134 = vset.pattern.permute.xlu0 0
    %135 = vperm.xlu0 %134, %v97
    %v136 = vpop.permute.xlu0 %135
    %139 = vset.pattern.permute.xlu0 0
    %140 = vperm.xlu0 %139, %v98
    %v141 = vpop.permute.xlu0 %140
    %144 = vset.pattern.permute.xlu0 0
    %145 = vperm.xlu0 %144, %v99
    %v146 = vpop.permute.xlu0 %145
    %149 = vset.pattern.permute.xlu0 0
    %150 = vperm.xlu0 %149, %v100
    %v151 = vpop.permute.xlu0 %150
    %v153 = vmul.f32 %v116, %v105
    %v154 = vmul.f32 %v121, %v106
    %v155 = vmul.f32 %v126, %v107
    %v156 = vmul.f32 %v131, %v108
    %v157 = vmul.f32 %v136, %v109
    %v158 = vmul.f32 %v141, %v110
    %v159 = vmul.f32 %v146, %v111
    %v160 = vmul.f32 %v151, %v112
    %v161 = vadd.f32 %v103, %v153
    %v162 = vadd.f32 %v103, %v154
    %v163 = vadd.f32 %v103, %v155
    %v164 = vadd.f32 %v103, %v156
    %v165 = vadd.f32 %v103, %v157
    %v166 = vadd.f32 %v103, %v158
    %v167 = vadd.f32 %v103, %v159
    %v168 = vadd.f32 %v103, %v160
    %169 = vst [vmem:[#allocation2] sm:$0xff] %v161
    %170 = vst [vmem:[#allocation2 + $0x8] sm:$0xff] %v162
    %171 = vst [vmem:[#allocation2 + $0x10] sm:$0xff] %v163
    %172 = vst [vmem:[#allocation2 + $0x18] sm:$0xff] %v164
    %173 = vst [vmem:[#allocation2 + $0x20] sm:$0xff] %v165
    %174 = vst [vmem:[#allocation2 + $0x28] sm:$0xff] %v166
    %175 = vst [vmem:[#allocation2 + $0x30] sm:$0xff] %v167
    %176 = vst [vmem:[#allocation2 + $0x38] sm:$0xff] %v168
    // Predicated region
    $region18: #{tpu_custom_call.1} parent=1 // pred_check
      _
    $region19: #{tpu_custom_call.1} parent=1 // pred_check_branch
      %178 = sbr.rel (0) target = $region21
    $region20: #{tpu_custom_call.1} parent=1 // pred_region
      %180 = vsyncadd [#allocation3], 0
      %s181 = sshll.u32 [#allocation2], 4
      %s182 = int_to_ptr.vmem [resolvable:$true] %s181
      %s183 = sshll.u32 %s4, 4
      %s184 = int_to_ptr.hbm [resolvable:$true] %s183
      %189 = dma.vmem_to_hbm [thread:$0]  %s182, 1024, %s184, [#allocation3], 128, 128, 8
    $region21: #{tpu_custom_call.1} parent=1 // pred_fallthru
      _
    // Predicated region
    $region22: #{tpu_custom_call.1} parent=1 // pred_check
      _
    $region23: #{tpu_custom_call.1} parent=1 // pred_check_branch
      %191 = sbr.rel (0) target = $region25
    $region24: #{tpu_custom_call.1} parent=1 // pred_region
      %193 = dma.done [#allocation3], 1024
    $region25: #{tpu_custom_call.1} parent=1 // pred_fallthru
      _
    %194 = vsyncpa [#allocation3], 1

</llo_original>
